<compile_context>
chip_gen: v5e
topology: v5e:2x2
jax: 0.10.0
libtpu: 0.0.40
codegen_flags: <defaults>
</compile_context>

<pallas_src>
import functools

import numpy as np

import jax
import jax.numpy as jnp
from jax.experimental import pallas as pl
from jax.experimental.pallas import tpu as pltpu


# ----------------------------- parameter setup ------------------------------

def _round_up(x: int, m: int) -> int:
    return ((x + m - 1) // m) * m


def _gaussian_kernel1d(kernel_size: int, sigma: float) -> np.ndarray:
    """Matches MyGaussianConv._get_gaussian_kernel1d (numpy, trace-time)."""
    half = (kernel_size - 1) * 0.5
    x = np.linspace(-half, half, num=kernel_size, dtype=np.float64)
    pdf = np.exp(-0.5 * np.square(x / sigma))
    return (pdf / pdf.sum()).astype(np.float32)


# ------------------------------ Pallas kernel --------------------------------

def _gaussian_conv_kernel(main_ref, halo_ref, o_ref, *,
                          k1y, k1x, stride, tile_oh, out_wp, r_rows, wvm):
    """One output row-tile.

    main_ref: (r_rows, wvm)  rows [i*r_rows, (i+1)*r_rows) of the padded image
    halo_ref: (halo8, wvm)   the first halo rows of the *next* strip
    o_ref:    (tile_oh, out_wp) output tile (lane-dense, 128-multiple width)

    out[r, j] = sum_a sum_b k1y[a]*k1x[b] * x[r*stride + a, j*stride + b]
    computed as a vertical pass (sublane shifts) then a horizontal pass
    (lane shifts), each with 2 partial accumulators.
    """
    kh = len(k1y)
    kw = len(k1x)

    # ---------------- vertical (sublane) pass ----------------
    if stride == 1:
        # tile_oh == r_rows; tap a reads rows [a, a + tile_oh), which may
        # spill into the halo block for the last a rows.
        def tap_rows(a):
            if a == 0:
                return main_ref[...]
            return jnp.concatenate(
                [main_ref[pl.ds(a, r_rows - a), :],
                 halo_ref[pl.ds(0, a), :]],
                axis=0)

        vparts = [None, None]
        for a in range(kh):
            term = k1y[a] * tap_rows(a)
            s = a & 1
            vparts[s] = term if vparts[s] is None else vparts[s] + term
        tmp = vparts[0] if vparts[1] is None else vparts[0] + vparts[1]
    else:
        # TODO(synk): stride>1 path loads the full strip once and uses a
        # sublane-strided slice per tap (sublane stride only; the lane-dim
        # decimation happens once at the end of the horizontal pass).
        strip = jnp.concatenate([main_ref[...], halo_ref[...]], axis=0)
        vparts = [None, None]
        for a in range(kh):
            rows = jax.lax.slice(
                strip, (a, 0),
                (a + (tile_oh - 1) * stride + 1, wvm),
                (stride, 1))
            term = k1y[a] * rows
            s = a & 1
            vparts[s] = term if vparts[s] is None else vparts[s] + term
        tmp = vparts[0] if vparts[1] is None else vparts[0] + vparts[1]

    # ---------------- horizontal (lane) pass ----------------
    if stride == 1:
        hparts = [None, None]
        for b in range(kw):
            term = k1x[b] * jax.lax.slice(tmp, (0, b), (tile_oh, b + out_wp))
            s = b & 1
            hparts[s] = term if hparts[s] is None else hparts[s] + term
        res = hparts[0] if hparts[1] is None else hparts[0] + hparts[1]
    else:
        # Full-resolution horizontal conv, then a single lane decimation.
        full_w = (out_wp - 1) * stride + 1
        hparts = [None, None]
        for b in range(kw):
            term = k1x[b] * jax.lax.slice(tmp, (0, b), (tile_oh, b + full_w))
            s = b & 1
            hparts[s] = term if hparts[s] is None else hparts[s] + term
        full = hparts[0] if hparts[1] is None else hparts[0] + hparts[1]
        res = jax.lax.slice(full, (0, 0), (tile_oh, full_w), (1, stride))

    o_ref[...] = res.astype(o_ref.dtype)


# ------------------------------ host wrapper ---------------------------------

def gaussian_conv_forward(x_nchw: jnp.ndarray,
                          kernel_size=(5, 5),
                          sigma=(1.0, 1.0),
                          stride: int = 1,
                          tile_oh: int | None = None) -> jnp.ndarray:
    """Equivalent of MyGaussianConv(kernel_size, sigma, stride).forward(x)."""
    H, W = int(x_nchw.shape[-2]), int(x_nchw.shape[-1])
    assert int(np.prod(x_nchw.shape[:-2])) == 1, "expects N=C=1 (module squeezes)"
    # Squeeze only the leading size-1 dims (robust even when H or W == 1).
    x = jnp.asarray(x_nchw, jnp.float32).reshape(H, W)

    # Separable Gaussian taps (Python floats -> baked as immediates).
    k1x = _gaussian_kernel1d(kernel_size[0], sigma[0])   # horizontal taps
    k1y = _gaussian_kernel1d(kernel_size[1], sigma[1])   # vertical taps
    kh, kw = int(k1y.shape[0]), int(k1x.shape[0])        # kernel is (kh, kw)
    pad_h, pad_w = kh // 2, kw // 2

    # Reflect (mirror, excluding edge) padding — identical to the module's pad.
    xp = jnp.pad(x, ((pad_h, pad_h), (pad_w, pad_w)), mode="reflect")
    hp, wp = H + 2 * pad_h, W + 2 * pad_w
    out_h = (hp - kh) // stride + 1
    out_w = (wp - kw) // stride + 1

    # ---- tiling parameters --------------------------------------------------
    # Halo rows needed per row tile = kh - 1, rounded up to a sublane multiple.
    halo8 = max(8, _round_up(max(kh - 1, 1), 8))
    if tile_oh is None:
        tile_oh = 8 if out_h <= 256 else 128
    tile_oh = _round_up(max(tile_oh, 8), halo8)          # => r_rows % halo8 == 0
    r_rows = tile_oh * stride                            # input rows per tile
    nt = (out_h + tile_oh - 1) // tile_oh                # grid size (row tiles)

    out_wp = _round_up(out_w, 128)                       # lane-dense output
    wvm = _round_up(max(wp, (out_wp - 1) * stride + kw), 128)
    rows_total = nt * r_rows + halo8

    # Zero-pad to the tiled layout (extra rows/cols only feed discarded output).
    xp_vm = jnp.pad(xp, ((0, rows_total - hp), (0, wvm - wp)))

    halo_blocks_per_tile = r_rows // halo8
    main_index_map = lambda i: (i, 0)
    halo_index_map = lambda i: ((i + 1) * halo_blocks_per_tile, 0)
    out_index_map = lambda i: (i, 0)

    kernel_fn = functools.partial(
        _gaussian_conv_kernel,
        k1y=tuple(float(v) for v in k1y),
        k1x=tuple(float(v) for v in k1x),
        stride=stride, tile_oh=tile_oh, out_wp=out_wp,
        r_rows=r_rows, wvm=wvm)

    out_full = pl.pallas_call(
        kernel_fn,
        out_shape=jax.ShapeDtypeStruct((nt * tile_oh, out_wp), jnp.float32),
        grid=(nt,),
        in_specs=[
            pl.BlockSpec((r_rows, wvm), main_index_map),   # main row strip
            pl.BlockSpec((halo8, wvm), halo_index_map),    # thin halo strip
        ],
        out_specs=pl.BlockSpec((tile_oh, out_wp), out_index_map),
        compiler_params=pltpu.CompilerParams(
            dimension_semantics=("parallel",)),            # row tiles independent
    )(xp_vm, xp_vm)

    return out_full[:out_h, :out_w]


# ------------------------------ reference check ------------------------------

def _reference_forward(x_nchw, kernel_size=(5, 5), sigma=(1.0, 1.0), stride=1):
    H, W = int(x_nchw.shape[-2]), int(x_nchw.shape[-1])
    x = jnp.asarray(x_nchw, jnp.float32).reshape(H, W)
    k1x = _gaussian_kernel1d(kernel_size[0], sigma[0])
    k1y = _gaussian_kernel1d(kernel_size[1], sigma[1])
    kern = jnp.asarray(np.outer(k1y, k1x), jnp.float32)   # (kh, kw), = torch.mm
    kh, kw = kern.shape
    xp = jnp.pad(x, ((kh // 2, kh // 2), (kw // 2, kw // 2)), mode="reflect")
    hp, wp = xp.shape
    out_h = (hp - kh) // stride + 1
    out_w = (wp - kw) // stride + 1
    out = jnp.zeros((out_h, out_w), jnp.float32)
    for a in range(kh):
        for b in range(kw):
            win = jax.lax.slice(
                xp, (a, b),
                (a + (out_h - 1) * stride + 1, b + (out_w - 1) * stride + 1),
                (stride, stride))
            out = out + kern[a, b] * win
    return out


if __name__ == "__main__":
    key = jax.random.PRNGKey(0)
    # NCHW input (N=C=1), squeezed to a single 16x16 image inside forward.
    x = jax.random.normal(key, (1, 1, 16, 16), dtype=jnp.float32)

    kernel_size = (5, 5)
    sigma = (1.0, 1.0)
    stride = 1

    out = gaussian_conv_forward(x, kernel_size, sigma, stride)
    out = jax.block_until_ready(out)

    ref = _reference_forward(x, kernel_size, sigma, stride)
    assert out.shape == ref.shape, (out.shape, ref.shape)
    assert jnp.allclose(out, ref, atol=1e-5, rtol=1e-5), "mismatch vs reference"

    print("KERNEL_OK")
</pallas_src>

<mosaic_0001>
module attributes {stable_mosaic.version = 11 : i64} {
  func.func @_gaussian_conv_kernel(%arg0: i32, %arg1: memref<8x256xf32, #tpu.memory_space<vmem>>, %arg2: memref<8x256xf32, #tpu.memory_space<vmem>>, %arg3: memref<8x128xf32, #tpu.memory_space<vmem>>) attributes {dimension_semantics = [#tpu.dimension_semantics<parallel>], iteration_bounds = array<i64: 2>, scalar_prefetch = 0 : i64, scratch_operands = 0 : i64, tpu.core_type = #tpu.core_type<tc>, window_params = [{transform_indices = @transform_0, window_bounds = array<i64: 8, 256>}, {transform_indices = @transform_1, window_bounds = array<i64: 8, 256>}, {transform_indices = @transform_2, window_bounds = array<i64: 8, 128>}]} {
    %c0 = arith.constant 0 : index
    %c0_0 = arith.constant 0 : index
    %0 = vector.load %arg1[%c0, %c0_0] : memref<8x256xf32, #tpu.memory_space<vmem>>, vector<8x256xf32>
    %cst = arith.constant 0.054488685 : f32
    %1 = vector.broadcast %cst : f32 to vector<8x256xf32>
    %2 = arith.mulf %1, %0 : vector<8x256xf32>
    %c1 = arith.constant 1 : index
    %c0_1 = arith.constant 0 : index
    %3 = vector.load %arg1[%c1, %c0_1] : memref<8x256xf32, #tpu.memory_space<vmem>>, vector<7x256xf32>
    %c0_2 = arith.constant 0 : index
    %c0_3 = arith.constant 0 : index
    %4 = vector.load %arg2[%c0_2, %c0_3] : memref<8x256xf32, #tpu.memory_space<vmem>>, vector<1x256xf32>
    %5 = tpu.concatenate %3, %4 in 0 : vector<7x256xf32>, vector<1x256xf32> -> vector<8x256xf32>
    %cst_4 = arith.constant 0.244201347 : f32
    %6 = vector.broadcast %cst_4 : f32 to vector<8x256xf32>
    %7 = arith.mulf %6, %5 : vector<8x256xf32>
    %c2 = arith.constant 2 : index
    %c0_5 = arith.constant 0 : index
    %8 = vector.load %arg1[%c2, %c0_5] : memref<8x256xf32, #tpu.memory_space<vmem>>, vector<6x256xf32>
    %c0_6 = arith.constant 0 : index
    %c0_7 = arith.constant 0 : index
    %9 = vector.load %arg2[%c0_6, %c0_7] : memref<8x256xf32, #tpu.memory_space<vmem>>, vector<2x256xf32>
    %10 = tpu.concatenate %8, %9 in 0 : vector<6x256xf32>, vector<2x256xf32> -> vector<8x256xf32>
    %cst_8 = arith.constant 0.402619958 : f32
    %11 = vector.broadcast %cst_8 : f32 to vector<8x256xf32>
    %12 = arith.mulf %11, %10 : vector<8x256xf32>
    %13 = arith.addf %2, %12 : vector<8x256xf32>
    %c3 = arith.constant 3 : index
    %c0_9 = arith.constant 0 : index
    %14 = vector.load %arg1[%c3, %c0_9] : memref<8x256xf32, #tpu.memory_space<vmem>>, vector<5x256xf32>
    %c0_10 = arith.constant 0 : index
    %c0_11 = arith.constant 0 : index
    %15 = vector.load %arg2[%c0_10, %c0_11] : memref<8x256xf32, #tpu.memory_space<vmem>>, vector<3x256xf32>
    %16 = tpu.concatenate %14, %15 in 0 : vector<5x256xf32>, vector<3x256xf32> -> vector<8x256xf32>
    %cst_12 = arith.constant 0.244201347 : f32
    %17 = vector.broadcast %cst_12 : f32 to vector<8x256xf32>
    %18 = arith.mulf %17, %16 : vector<8x256xf32>
    %19 = arith.addf %7, %18 : vector<8x256xf32>
    %c4 = arith.constant 4 : index
    %c0_13 = arith.constant 0 : index
    %20 = vector.load %arg1[%c4, %c0_13] : memref<8x256xf32, #tpu.memory_space<vmem>>, vector<4x256xf32>
    %c0_14 = arith.constant 0 : index
    %c0_15 = arith.constant 0 : index
    %21 = vector.load %arg2[%c0_14, %c0_15] : memref<8x256xf32, #tpu.memory_space<vmem>>, vector<4x256xf32>
    %22 = tpu.concatenate %20, %21 in 0 : vector<4x256xf32>, vector<4x256xf32> -> vector<8x256xf32>
    %cst_16 = arith.constant 0.054488685 : f32
    %23 = vector.broadcast %cst_16 : f32 to vector<8x256xf32>
    %24 = arith.mulf %23, %22 : vector<8x256xf32>
    %25 = arith.addf %13, %24 : vector<8x256xf32>
    %26 = arith.addf %25, %19 : vector<8x256xf32>
    %27 = vector.extract_strided_slice %26 {offsets = [0, 0], sizes = [8, 128], strides = [1, 1]} : vector<8x256xf32> to vector<8x128xf32>
    %cst_17 = arith.constant 0.054488685 : f32
    %28 = vector.broadcast %cst_17 : f32 to vector<8x128xf32>
    %29 = arith.mulf %28, %27 : vector<8x128xf32>
    %30 = vector.extract_strided_slice %26 {offsets = [0, 1], sizes = [8, 128], strides = [1, 1]} : vector<8x256xf32> to vector<8x128xf32>
    %cst_18 = arith.constant 0.244201347 : f32
    %31 = vector.broadcast %cst_18 : f32 to vector<8x128xf32>
    %32 = arith.mulf %31, %30 : vector<8x128xf32>
    %33 = vector.extract_strided_slice %26 {offsets = [0, 2], sizes = [8, 128], strides = [1, 1]} : vector<8x256xf32> to vector<8x128xf32>
    %cst_19 = arith.constant 0.402619958 : f32
    %34 = vector.broadcast %cst_19 : f32 to vector<8x128xf32>
    %35 = arith.mulf %34, %33 : vector<8x128xf32>
    %36 = arith.addf %29, %35 : vector<8x128xf32>
    %37 = vector.extract_strided_slice %26 {offsets = [0, 3], sizes = [8, 128], strides = [1, 1]} : vector<8x256xf32> to vector<8x128xf32>
    %cst_20 = arith.constant 0.244201347 : f32
    %38 = vector.broadcast %cst_20 : f32 to vector<8x128xf32>
    %39 = arith.mulf %38, %37 : vector<8x128xf32>
    %40 = arith.addf %32, %39 : vector<8x128xf32>
    %41 = vector.extract_strided_slice %26 {offsets = [0, 4], sizes = [8, 128], strides = [1, 1]} : vector<8x256xf32> to vector<8x128xf32>
    %cst_21 = arith.constant 0.054488685 : f32
    %42 = vector.broadcast %cst_21 : f32 to vector<8x128xf32>
    %43 = arith.mulf %42, %41 : vector<8x128xf32>
    %44 = arith.addf %36, %43 : vector<8x128xf32>
    %45 = arith.addf %44, %40 : vector<8x128xf32>
    %c0_22 = arith.constant 0 : index
    %c0_23 = arith.constant 0 : index
    %46 = vector.load %arg3[%c0_22, %c0_23] : memref<8x128xf32, #tpu.memory_space<vmem>>, vector<8x128xf32>
    tpu.vector_store %arg3[%c0_22, %c0_23], %45 {strides = array<i32>} : memref<8x128xf32, #tpu.memory_space<vmem>>, vector<8x128xf32>,
    return
  }
  func.func @transform_0(%arg0: i32) -> (i32, i32) {
    %c0_i32 = arith.constant 0 : i32
    %c0_i32_0 = arith.constant 0 : i32
    return %arg0, %c0_i32 : i32, i32
  }
  func.func @transform_1(%arg0: i32) -> (i32, i32) {
    %c1_i32 = arith.constant 1 : i32
    %0 = arith.addi %arg0, %c1_i32 : i32
    %c1_i32_0 = arith.constant 1 : i32
    %1 = arith.muli %0, %c1_i32_0 : i32
    %c0_i32 = arith.constant 0 : i32
    %c0_i32_1 = arith.constant 0 : i32
    return %1, %c0_i32 : i32, i32
  }
  func.func @transform_2(%arg0: i32) -> (i32, i32) {
    %c0_i32 = arith.constant 0 : i32
    %c0_i32_0 = arith.constant 0 : i32
    return %arg0, %c0_i32 : i32, i32
  }
}

</mosaic_0001>

<llo_original>
// kernel: tpu_custom_call.1
$region0: #{tpu_custom_call.1}
  #allocation0 [shape = 'u32[]', space=smem, size = 0x4, offset = 0x4, fixed_abs, tag = 'smem constant byte address 0x4 - core index']
  #allocation1 [shape = 'u32[72,128]{1,0:T(1,128)}', space=vmem, size = 0x9000, scoped, tag = 'internal scratch']
  %s0 = inlined_call_operand.hbm [shape: f32[24,256], index: 0, kind: input, shape index: {}]
  %s1 = inlined_call_operand.hbm [shape: f32[24,256], index: 1, kind: input, shape index: {}]
  %s2 = inlined_call_operand.hbm [shape: f32[16,128], index: 2, kind: output, shape index: {}]
  %s3 = sld [smem:[#allocation0]]
  $region49: #{tpu_custom_call.1} parent=0
    _
  %s5 = ssub.s32 1, %s3
  %s6 = scalar_select 0, %s5, %s3
  $region1: #{tpu_custom_call.1} parent=0
    #allocation2 [shape = 'u8[16384]{0}', space=vmem, size = 0x4000, scoped, tag = 'input window, operand 0']
    #allocation3 [shape = 's32[2]{0}', space=sflag, size = 0x8, scoped, tag = 'scoped memory for tpu_custom_call.1']
    #allocation4 [shape = 's32[2]{0}', space=sflag, size = 0x8, scoped, tag = 'scoped memory for tpu_custom_call.1']
    #allocation5 [shape = 'u8[16384]{0}', space=vmem, size = 0x4000, scoped, tag = 'input window, operand 1']
    #allocation6 [shape = 's32[2]{0}', space=sflag, size = 0x8, scoped, tag = 'scoped memory for tpu_custom_call.1']
    #allocation7 [shape = 'u8[8192]{0}', space=vmem, size = 0x2000, scoped, tag = 'output window, operand 0']
    %7 = vsyncpa [#allocation3], 0
    %s8 = scalar_lea.sflag [#allocation3], 1
    %9 = vsyncpa %s8, 0
    %10 = vsyncpa [#allocation6], 0
    %s11 = scalar_lea.sflag [#allocation6], 1
    %12 = vsyncpa %s11, 0
    %13 = vsyncpa [#allocation4], 0
    %s14 = scalar_lea.sflag [#allocation4], 1
    %15 = vsyncpa %s14, 0
    loop: start=0, step=1, limit=4
    $region2: #{tpu_custom_call.1} parent=1 // loop_pre_header
      _
    $region3: #{tpu_custom_call.1} parent=1 // loop_header
      %s17 = sphi 0, %s21
      %p18 = scmp.ge.s32.totalorder %s17, 4
      %s27 = sphi 0, %s29
      %s30 = sphi 0, %s27
      %s31 = sphi 0, %s30
      %s47 = sphi 0, %s31
      %s55 = sphi 0, %s57
      %s58 = sphi 0, %s55
      %s59 = sphi 0, %s58
      %s75 = sphi 0, %s59
      %s81 = sphi 0, %s83
      %s84 = sphi 0, %s81
      %s85 = sphi 0, %s84
      %s101 = sphi 0, %s85
    $region4: #{tpu_custom_call.1} parent=1 // loop_header_branch
      %20 = sbr.rel (%p18) target = $region8
    $region5: #{tpu_custom_call.1} parent=1 // loop_body
      %s22 = ssub.s32 %s17, 1
      %s23 = ssub.s32 %s17, 2
      %s24 = sadd.s32 %s17, 1
      %s25 = ssub.s32 %s17, %s24
      %p26 = scmp.eq.s32.totalorder %s25, 0
      %s28 = sadd.s32 %s27, 1
      %s29 = scalar_select %p26, %s27, %s28
      %p32 = pneg %p26
      %p33 = scmp.eq.s32.totalorder %s17, 1
      %p34 = por %p32, %p33
      %p35 = scmp.ne.s32.totalorder %s27, %s30
      %p36 = scmp.eq.s32.totalorder %s17, 0
      %p37 = por %p35, %p36
      %p38 = scmp.ne.s32.totalorder %s27, %s30
      %p39 = scmp.eq.s32.totalorder %s22, 1
      %p40 = por %p38, %p39
      %p41 = scmp.ne.s32.totalorder %s30, %s31
      %p42 = scmp.eq.s32.totalorder %s22, 0
      %p43 = por %p41, %p42
      %p44 = scmp.ne.s32.totalorder %s30, %s31
      %p45 = scmp.eq.s32.totalorder %s23, 1
      %p46 = por %p44, %p45
      %p48 = scmp.ne.s32.totalorder %s31, %s47
      %p49 = scmp.eq.s32.totalorder %s23, 0
      %p50 = por %p48, %p49
      %s51 = sadd.s32 %s17, 1
      %s52 = sadd.s32 %s24, 1
      %s53 = ssub.s32 %s51, %s52
      %p54 = scmp.eq.s32.totalorder %s53, 0
      %s56 = sadd.s32 %s55, 1
      %s57 = scalar_select %p54, %s55, %s56
      %p60 = pneg %p54
      %p61 = scmp.eq.s32.totalorder %s17, 1
      %p62 = por %p60, %p61
      %p63 = scmp.ne.s32.totalorder %s55, %s58
      %p64 = scmp.eq.s32.totalorder %s17, 0
      %p65 = por %p63, %p64
      %p66 = scmp.ne.s32.totalorder %s55, %s58
      %p67 = scmp.eq.s32.totalorder %s22, 1
      %p68 = por %p66, %p67
      %p69 = scmp.ne.s32.totalorder %s58, %s59
      %p70 = scmp.eq.s32.totalorder %s22, 0
      %p71 = por %p69, %p70
      %p72 = scmp.ne.s32.totalorder %s58, %s59
      %p73 = scmp.eq.s32.totalorder %s23, 1
      %p74 = por %p72, %p73
      %p76 = scmp.ne.s32.totalorder %s59, %s75
      %p77 = scmp.eq.s32.totalorder %s23, 0
      %p78 = por %p76, %p77
      %s79 = ssub.s32 %s17, %s24
      %p80 = scmp.eq.s32.totalorder %s79, 0
      %s82 = sadd.s32 %s81, 1
      %s83 = scalar_select %p80, %s81, %s82
      %p86 = pneg %p80
      %p87 = scmp.eq.s32.totalorder %s17, 1
      %p88 = por %p86, %p87
      %p89 = scmp.ne.s32.totalorder %s81, %s84
      %p90 = scmp.eq.s32.totalorder %s17, 0
      %p91 = por %p89, %p90
      %p92 = scmp.ne.s32.totalorder %s81, %s84
      %p93 = scmp.eq.s32.totalorder %s22, 1
      %p94 = por %p92, %p93
      %p95 = scmp.ne.s32.totalorder %s84, %s85
      %p96 = scmp.eq.s32.totalorder %s22, 0
      %p97 = por %p95, %p96
      %p98 = scmp.ne.s32.totalorder %s84, %s85
      %p99 = scmp.eq.s32.totalorder %s23, 1
      %p100 = por %p98, %p99
      %p102 = scmp.ne.s32.totalorder %s85, %s101
      %p103 = scmp.eq.s32.totalorder %s23, 0
      %p104 = por %p102, %p103
      %p105 = scmp.le.s32.totalorder 1, %s17
      %p106 = scmp.lt.s32.totalorder %s17, 3
      %p107 = pnand %p105, %p106
      %p108 = pneg %p107
      // Predicated region
      $region9: #{tpu_custom_call.1} parent=5 // pred_check
        _
      $region10: #{tpu_custom_call.1} parent=5 // pred_check_branch
        %110 = sbr.rel (%p107) target = $region12
      $region11: #{tpu_custom_call.1} parent=5 // pred_region
        %s111 = ssub.s32 %s17, 1
      $region12: #{tpu_custom_call.1} parent=5 // pred_fallthru
        _
      %p112 = scmp.lt.s32.totalorder %s17, 2
      // Predicated region
      $region13: #{tpu_custom_call.1} parent=5 // pred_check
        %p113 = pneg %p112
      $region14: #{tpu_custom_call.1} parent=5 // pred_check_branch
        %115 = sbr.rel (%p113) target = $region16
      $region15: #{tpu_custom_call.1} parent=5 // pred_region
        // Predicated region
        $region17: #{tpu_custom_call.1} parent=15 // pred_check
          %p116 = pneg %p37
        $region18: #{tpu_custom_call.1} parent=15 // pred_check_branch
          %118 = sbr.rel (%p116) target = $region20
        $region19: #{tpu_custom_call.1} parent=15 // pred_region
          %s119 = sand.u32 %s27, 1
          %s120 = scalar_lea.sflag [#allocation3], %s119
          %s121 = sand.u32 %s27, 1
          %s122 = smul.addr %s121, 16
          %s123 = scalar_lea.vmem [#allocation2], %s122
          %125 = vsyncadd %s120, 0
          %s126 = smul.addr %s17, 2
          %s127 = smul.addr %s126, 8
          %s128 = scalar_lea.hbm %s0, %s127
          %s130 = sshll.u32 %s128, 4
          %s131 = int_to_ptr.hbm [resolvable:$true] %s130
          %s132 = sshll.u32 %s123, 4
          %s133 = int_to_ptr.vmem [resolvable:$true] %s132
          %135 = dma.hbm_to_vmem [thread:$0]  %s131, 256, %s133, %s120
        $region20: #{tpu_custom_call.1} parent=15 // pred_fallthru
          _
        // Predicated region
        $region21: #{tpu_custom_call.1} parent=15 // pred_check
          %p136 = pneg %p65
        $region22: #{tpu_custom_call.1} parent=15 // pred_check_branch
          %138 = sbr.rel (%p136) target = $region24
        $region23: #{tpu_custom_call.1} parent=15 // pred_region
          %s139 = sand.u32 %s55, 1
          %s140 = scalar_lea.sflag [#allocation6], %s139
          %s141 = sand.u32 %s55, 1
          %s142 = smul.addr %s141, 16
          %s143 = scalar_lea.vmem [#allocation5], %s142
          %s144 = sadd.s32 %s17, 1
          %146 = vsyncadd %s140, 0
          %s147 = smul.addr %s144, 2
          %s148 = smul.addr %s147, 8
          %s149 = scalar_lea.hbm %s1, %s148
          %s151 = sshll.u32 %s149, 4
          %s152 = int_to_ptr.hbm [resolvable:$true] %s151
          %s153 = sshll.u32 %s143, 4
          %s154 = int_to_ptr.vmem [resolvable:$true] %s153
          %156 = dma.hbm_to_vmem [thread:$0]  %s152, 256, %s154, %s140
        $region24: #{tpu_custom_call.1} parent=15 // pred_fallthru
          _
      $region16: #{tpu_custom_call.1} parent=5 // pred_fallthru
        _
      %p157 = scmp.le.s32.totalorder 1, %s17
      %p158 = scmp.lt.s32.totalorder %s17, 3
      %p159 = pnand %p157, %p158
      %p160 = pneg %p159
      // Predicated region
      $region25: #{tpu_custom_call.1} parent=5 // pred_check
        _
      $region26: #{tpu_custom_call.1} parent=5 // pred_check_branch
        %162 = sbr.rel (%p159) target = $region28
      $region27: #{tpu_custom_call.1} parent=5 // pred_region
        %s163 = ssub.s32 %s17, 1
        %s164 = sand.u32 %s30, 1
        %s165 = scalar_lea.sflag [#allocation3], %s164
        %s166 = sand.u32 %s30, 1
        %s167 = smul.addr %s166, 16
        %s168 = scalar_lea.vmem [#allocation2], %s167
        // Predicated region
        $region29: #{tpu_custom_call.1} parent=27 // pred_check
          %p169 = pneg %p43
        $region30: #{tpu_custom_call.1} parent=27 // pred_check_branch
          %171 = sbr.rel (%p169) target = $region32
        $region31: #{tpu_custom_call.1} parent=27 // pred_region
          %173 = dma.done %s165, 256
        $region32: #{tpu_custom_call.1} parent=27 // pred_fallthru
          _
        %s174 = sand.u32 %s58, 1
        %s175 = scalar_lea.sflag [#allocation6], %s174
        %s176 = sand.u32 %s58, 1
        %s177 = smul.addr %s176, 16
        %s178 = scalar_lea.vmem [#allocation5], %s177
        // Predicated region
        $region33: #{tpu_custom_call.1} parent=27 // pred_check
          %p179 = pneg %p71
        $region34: #{tpu_custom_call.1} parent=27 // pred_check_branch
          %181 = sbr.rel (%p179) target = $region36
        $region35: #{tpu_custom_call.1} parent=27 // pred_region
          %183 = dma.done %s175, 256
        $region36: #{tpu_custom_call.1} parent=27 // pred_fallthru
          _
        %s184 = sand.u32 %s30, 1
        %s185 = scalar_lea.sflag [#allocation3], %s184
        %s186 = sand.u32 %s30, 1
        %s187 = smul.addr %s186, 16
        %s188 = scalar_lea.vmem [#allocation2], %s187
        %p189 = pneg %p43
        %p190 = pneg %p40
        %s191 = sand.u32 %s58, 1
        %s192 = scalar_lea.sflag [#allocation6], %s191
        %s193 = sand.u32 %s58, 1
        %s194 = smul.addr %s193, 16
        %s195 = scalar_lea.vmem [#allocation5], %s194
        %p196 = pneg %p71
        %p197 = pneg %p68
        %p198 = pneg %p97
        %p199 = pneg %p94
        %s200 = sand.u32 %s84, 1
        %s201 = scalar_lea.sflag [#allocation4], %s200
        %s202 = sand.u32 %s84, 1
        %s203 = smul.addr %s202, 8
        %s204 = scalar_lea.vmem [#allocation7], %s203
        %s205 = sadd.s32 %s22, 1
        %v206 = vld [vmem:[%s168] sm:$0xff]
        %v207 = vld [vmem:[%s168 + $0x8] sm:$0xff]
        %v208 = vmul.f32 %v206, 0.054488685
        %v209 = vmul.f32 %v207, 0.054488685
        %v210 = vld [vmem:[%s168] sm:$0xfe]
        %v211 = vld [vmem:[%s168 + $0x8] sm:$0xfe]
        %v212 = vld [vmem:[%s178] ss:$8 sm:$0x3]
        %v215 = vrot.slane %v210, 1
        %v216 = vrot.slane %v211, 1
        %v220 = vperm.slane %v212, 0
        %v221 = vperm.slane %v212, 1
        %vm224 = vcmask 1046528
        %v225 = vsel %vm224, %v215, %v220
        %v226 = vsel %vm224, %v216, %v221
        %v227 = vmul.f32 %v225, 0.24420135
        %v228 = vmul.f32 %v226, 0.24420135
        %v229 = vld [vmem:[%s168] sm:$0xfc]
        %v230 = vld [vmem:[%s168 + $0x8] sm:$0xfc]
        %v231 = vld [vmem:[%s178] sm:$0x3]
        %v232 = vld [vmem:[%s178 + $0x8] sm:$0x3]
        %v235 = vrot.slane %v229, 2
        %v236 = vrot.slane %v230, 2
        %v241 = vrot.slane %v231, 2
        %v242 = vrot.slane %v232, 2
        %vm245 = vcmask 1045504
        %v246 = vsel %vm245, %v235, %v241
        %v247 = vsel %vm245, %v236, %v242
        %v248 = vmul.f32 %v246, 0.40261996
        %v249 = vmul.f32 %v247, 0.40261996
        %v250 = vadd.f32 %v208, %v248
        %v251 = vadd.f32 %v209, %v249
        %v252 = vld [vmem:[%s168] sm:$0xf8]
        %v253 = vld [vmem:[%s168 + $0x8] sm:$0xf8]
        %v254 = vld [vmem:[%s178] sm:$0x7]
        %v255 = vld [vmem:[%s178 + $0x8] sm:$0x7]
        %v258 = vrot.slane %v252, 3
        %v259 = vrot.slane %v253, 3
        %v264 = vrot.slane %v254, 3
        %v265 = vrot.slane %v255, 3
        %vm268 = vcmask 1044480
        %v269 = vsel %vm268, %v258, %v264
        %v270 = vsel %vm268, %v259, %v265
        %v271 = vmul.f32 %v269, 0.24420135
        %v272 = vmul.f32 %v270, 0.24420135
        %v273 = vadd.f32 %v227, %v271
        %v274 = vadd.f32 %v228, %v272
        %v275 = vld [vmem:[%s168] sm:$0xf0]
        %v276 = vld [vmem:[%s168 + $0x8] sm:$0xf0]
        %v277 = vld [vmem:[%s178] sm:$0xf]
        %v278 = vld [vmem:[%s178 + $0x8] sm:$0xf]
        %v281 = vrot.slane %v275, 4
        %v282 = vrot.slane %v276, 4
        %v287 = vrot.slane %v277, 4
        %v288 = vrot.slane %v278, 4
        %vm291 = vcmask 1043456
        %v292 = vsel %vm291, %v281, %v287
        %v293 = vsel %vm291, %v282, %v288
        %v294 = vmul.f32 %v292, 0.054488685
        %v295 = vmul.f32 %v293, 0.054488685
        %v296 = vadd.f32 %v250, %v294
        %v297 = vadd.f32 %v251, %v295
        %v298 = vadd.f32 %v296, %v273
        %v299 = vadd.f32 %v297, %v274
        %v300 = vmul.f32 %v298, 0.054488685
        %v301 = vmul.f32 %v298, 0.24420135
        %v302 = vmul.f32 %v299, 0.24420135
        %v303 = vmul.f32 %v298, 0.40261996
        %v304 = vmul.f32 %v299, 0.40261996
        %307 = vrot.lane.b32.xlu0 %v303, 126
        %v308 = vpop.permute.xlu0 %307
        %309 = vrot.lane.b32.xlu0 %v304, 126
        %v310 = vpop.permute.xlu0 %309
        %vm311 = vcmask 1031168
        %v312 = vsel %vm311, %v308, %v310
        %v314 = vadd.f32 %v300, %v312
        %317 = vrot.lane.b32.xlu0 %v301, 126
        %v318 = vpop.permute.xlu0 %317
        %319 = vrot.lane.b32.xlu0 %v302, 126
        %v320 = vpop.permute.xlu0 %319
        %v321 = vsel %vm311, %v318, %v320
        %v324 = vadd.f32 %v301, %v321
        %v325 = vadd.f32 %v302, %v320
        %v326 = vmul.f32 %v299, 0.054488685
        %329 = vrot.lane.b32.xlu0 %v300, 124
        %v330 = vpop.permute.xlu0 %329
        %331 = vrot.lane.b32.xlu0 %v326, 124
        %v332 = vpop.permute.xlu0 %331
        %vm333 = vcmask 1014784
        %v334 = vsel %vm333, %v330, %v332
        %v336 = vadd.f32 %v314, %v334
        %339 = vrot.lane.b32.xlu0 %v324, 127
        %v340 = vpop.permute.xlu0 %339
        %341 = vrot.lane.b32.xlu0 %v325, 127
        %v342 = vpop.permute.xlu0 %341
        %vm343 = vcmask 1039360
        %v344 = vsel %vm343, %v340, %v342
        %v346 = vadd.f32 %v336, %v344
        %347 = vst [vmem:[%s204] sm:$0xff] %v346
        %s348 = sand.u32 %s84, 1
        %s349 = scalar_lea.sflag [#allocation4], %s348
        %s350 = sand.u32 %s84, 1
        %s351 = smul.addr %s350, 8
        %s352 = scalar_lea.vmem [#allocation7], %s351
        // Predicated region
        $region37: #{tpu_custom_call.1} parent=27 // pred_check
          %p353 = pneg %p94
        $region38: #{tpu_custom_call.1} parent=27 // pred_check_branch
          %355 = sbr.rel (%p353) target = $region40
        $region39: #{tpu_custom_call.1} parent=27 // pred_region
          %357 = vsyncadd %s349, 0
          %s358 = smul.addr %s22, 8
          %s359 = scalar_lea.hbm %s2, %s358
          %s361 = sshll.u32 %s352, 4
          %s362 = int_to_ptr.vmem [resolvable:$true] %s361
          %s363 = sshll.u32 %s359, 4
          %s364 = int_to_ptr.hbm [resolvable:$true] %s363
          %366 = dma.vmem_to_hbm [thread:$0]  %s362, 128, %s364, %s349
        $region40: #{tpu_custom_call.1} parent=27 // pred_fallthru
          _
      $region28: #{tpu_custom_call.1} parent=5 // pred_fallthru
        _
      %p367 = scmp.le.s32.totalorder 2, %s17
      // Predicated region
      $region41: #{tpu_custom_call.1} parent=5 // pred_check
        %p368 = pneg %p367
      $region42: #{tpu_custom_call.1} parent=5 // pred_check_branch
        %370 = sbr.rel (%p368) target = $region44
      $region43: #{tpu_custom_call.1} parent=5 // pred_region
        %s371 = ssub.s32 %s17, 2
        // Predicated region
        $region45: #{tpu_custom_call.1} parent=43 // pred_check
          %p372 = pneg %p100
        $region46: #{tpu_custom_call.1} parent=43 // pred_check_branch
          %374 = sbr.rel (%p372) target = $region48
        $region47: #{tpu_custom_call.1} parent=43 // pred_region
          %s375 = sand.u32 %s85, 1
          %s376 = scalar_lea.sflag [#allocation4], %s375
          %s377 = sand.u32 %s85, 1
          %s378 = smul.addr %s377, 8
          %s379 = scalar_lea.vmem [#allocation7], %s378
          %381 = dma.done %s376, 128
        $region48: #{tpu_custom_call.1} parent=43 // pred_fallthru
          _
      $region44: #{tpu_custom_call.1} parent=5 // pred_fallthru
        _
    $region6: #{tpu_custom_call.1} parent=1 // loop_footer
      %s21 = sadd.s32 1, %s17
    $region7: #{tpu_custom_call.1} parent=1 // loop_footer_branch
      %16 = sbr.rel target = $region3
    $region8: #{tpu_custom_call.1} parent=1 // loop_exit
      _
    %382 = vsyncpa [#allocation3], 1
    %s383 = scalar_lea.sflag [#allocation3], 1
    %384 = vsyncpa %s383, 1
    %385 = vsyncpa [#allocation6], 1
    %s386 = scalar_lea.sflag [#allocation6], 1
    %387 = vsyncpa %s386, 1
    %388 = vsyncpa [#allocation4], 1
    %s389 = scalar_lea.sflag [#allocation4], 1
    %390 = vsyncpa %s389, 1

</llo_original>
